<compile_context>
chip_gen: v5e
topology: v5e:2x2
jax: 0.10.0
libtpu: 0.0.40
codegen_flags: <defaults>
</compile_context>

<pallas_src>
import jax
import jax.numpy as jnp
from jax import lax
from jax.experimental import pallas as pl
from jax.experimental.pallas import tpu as pltpu


def mlp_kernel(x_ref, w1_ref, w2_ref, b2_ref, o_ref):
    # x_ref:  (TB, D)  compute dtype  (batch tile, one contiguous DMA per grid step)
    # w1_ref: (H, D)   compute dtype  (Linear(D,128,bias=False) weight, VMEM-resident)
    # w2_ref: (1, H)   float32        (Linear(128,1) weight, VMEM-resident)
    # b2_ref: (1, 1)   float32        (Linear(128,1) bias, SMEM scalar)
    # o_ref:  (1, TB)  float32        (lane-dense output slab, batch on lanes)
    #
    # Contract over D so the batch lands on the MXU lane axis: (H, D) x (TB, D)^T -> (H, TB).
    h = lax.dot_general(
        w1_ref[...], x_ref[...],
        dimension_numbers=(((1,), (1,)), ((), ())),
        preferred_element_type=jnp.float32,
    )
    # Dropout(p=0.5): identity in eval mode.
    # TODO(synk): training-mode dropout (pltpu.prng_seed / prng_random_bits mask + 2x scale).
    h = jnp.maximum(h, 0.0)                                                # ReLU
    logits = jnp.dot(w2_ref[...], h, preferred_element_type=jnp.float32)   # (1, TB)
    logits = logits + b2_ref[0, 0]                                         # scalar bias
    # Exact sigmoid: exp + exact reciprocal (both on the EUP slot).
    o_ref[...] = 1.0 / (1.0 + jnp.exp(-logits))


def _round_up(v, m):
    return ((v + m - 1) // m) * m


def sequential_model_forward(x, w1, w2, b2, *, compute_dtype=None,
                             vmem_budget_bytes=16 * 1024 * 1024):
    """sigmoid(relu(x @ w1.T) @ w2.T + b2).

    x: (B, D); w1: (128, D); w2: (1, 128); b2: (1,) — PyTorch (out, in) layouts.
    """
    B, D = x.shape
    H = w1.shape[0]  # 128

    # Default to x's dtype so the wrapper never adds a standalone HBM cast pass over x.
    if compute_dtype is None:
        compute_dtype = x.dtype
    isz = jnp.dtype(compute_dtype).itemsize

    # --- Batch-tile sizing -------------------------------------------------------
    # Per-step VMEM bytes per batch element:
    #   x tile (double-buffered)                      : 2 * D * isz
    #   f32 intermediate h (H, tb) (+headroom for ReLU copy): 2 * H * 4
    #   (1, tb) f32 output (double-buffered)          : 2 * 4
    per_tb_bytes = 2 * D * isz + 2 * H * 4 + 2 * 4
    tb_budget = max(128, (vmem_budget_bytes // per_tb_bytes) // 128 * 128)
    # Keep at least 2 grid steps so the "parallel" batch axis can use both v7x TCs.
    tb_split = max(128, _round_up(pl.cdiv(B, 2), 128))
    tb = int(min(tb_budget, tb_split))

    n_tiles = pl.cdiv(B, tb)   # last block may be partial; Pallas masks OOB output writes

    xc = jnp.asarray(x, compute_dtype)                 # no-op when dtypes already match
    w1c = jnp.asarray(w1, compute_dtype)               # tiny, VMEM-resident
    w2f = jnp.asarray(w2, jnp.float32).reshape(1, H)
    b2s = jnp.asarray(b2, jnp.float32).reshape(1, 1)   # SMEM scalar

    cost = pl.CostEstimate(
        flops=2 * B * D * H + 2 * B * H,
        transcendentals=B,
        bytes_accessed=B * D * isz + H * D * isz + H * 4 + 4 + B * 4,
    )

    out = pl.pallas_call(
        mlp_kernel,
        out_shape=jax.ShapeDtypeStruct((1, B), jnp.float32),
        grid=(n_tiles,),
        in_specs=[
            pl.BlockSpec((tb, D), lambda i: (i, 0)),              # x: contiguous tile per step
            pl.BlockSpec((H, D), lambda i: (0, 0)),               # W1: VMEM-resident
            pl.BlockSpec((1, H), lambda i: (0, 0)),               # W2: VMEM-resident
            pl.BlockSpec(memory_space=pltpu.MemorySpace.SMEM),    # bias scalar
        ],
        out_specs=pl.BlockSpec((1, tb), lambda i: (0, i)),        # lane-dense output
        compiler_params=pltpu.CompilerParams(
            dimension_semantics=("parallel",),      # batch tiles shard across v7x's 2 TCs
            vmem_limit_bytes=24 * 1024 * 1024,      # fits v5e/v6e (128 MiB) and v7x (64 MiB)
        ),
        cost_estimate=cost,
    )(xc, w1c, w2f, b2s)

    return out[0].reshape(B, 1)


if __name__ == "__main__":
    # input_dim=32, hidden=128 per the module; B=300 exercises two tiles + a partial block.
    B, D, H = 300, 32, 128
    key = jax.random.PRNGKey(0)
    kx, kw1, kw2, kb2 = jax.random.split(key, 4)

    x = jax.random.normal(kx, (B, D), dtype=jnp.float32)
    # Deterministic "synthetic checkpoint" parameters (PyTorch shapes: (out, in)).
    w1 = jax.random.normal(kw1, (H, D), dtype=jnp.float32) * 0.05  # Linear(D,128,bias=False)
    w2 = jax.random.normal(kw2, (1, H), dtype=jnp.float32) * 0.05  # Linear(128,1) weight
    b2 = jax.random.normal(kb2, (1,), dtype=jnp.float32) * 0.05    # Linear(128,1) bias

    # f32 path (module semantics).
    out = jax.block_until_ready(sequential_model_forward(x, w1, w2, b2))
    ref = jax.nn.sigmoid(jnp.maximum(x @ w1.T, 0.0) @ w2.T + b2)
    assert out.shape == (B, 1)
    assert jnp.allclose(out, ref, atol=5e-3, rtol=5e-3)

    # Larger batch: exercises the big-tile path (tb grows toward the VMEM budget).
    B2 = 4096
    x2 = jax.random.normal(kx, (B2, D), dtype=jnp.float32)
    out2 = jax.block_until_ready(sequential_model_forward(x2, w1, w2, b2))
    ref2 = jax.nn.sigmoid(jnp.maximum(x2 @ w1.T, 0.0) @ w2.T + b2)
    assert out2.shape == (B2, 1)
    assert jnp.allclose(out2, ref2, atol=5e-3, rtol=5e-3)

    # Opt-in bf16 x/W1 path (f32 accumulation). Worth it when x arrives as bf16 upstream.
    out_bf16 = jax.block_until_ready(
        sequential_model_forward(x, w1, w2, b2, compute_dtype=jnp.bfloat16))
    xb = x.astype(jnp.bfloat16).astype(jnp.float32)
    w1b = w1.astype(jnp.bfloat16).astype(jnp.float32)
    ref_bf16 = jax.nn.sigmoid(jnp.maximum(xb @ w1b.T, 0.0) @ w2.T + b2)
    assert out_bf16.shape == (B, 1)
    assert jnp.allclose(out_bf16, ref_bf16, atol=1e-2, rtol=1e-2)

    print("KERNEL_OK")
</pallas_src>

<mosaic_0001>
module attributes {stable_mosaic.version = 11 : i64} {
  func.func @mlp_kernel(%arg0: i32, %arg1: memref<256x32xf32, #tpu.memory_space<vmem>>, %arg2: memref<128x32xf32, #tpu.memory_space<vmem>>, %arg3: memref<1x128xf32, #tpu.memory_space<vmem>>, %arg4: memref<1x1xf32, #tpu.memory_space<smem>>, %arg5: memref<1x256xf32, #tpu.memory_space<vmem>>) attributes {dimension_semantics = [#tpu.dimension_semantics<parallel>], iteration_bounds = array<i64: 2>, scalar_prefetch = 0 : i64, scratch_operands = 0 : i64, tpu.core_type = #tpu.core_type<tc>, window_params = [{transform_indices = @transform_0, window_bounds = array<i64: 256, 32>}, {pipeline_mode = #tpu.pipeline_mode<synchronous>, transform_indices = @transform_1, window_bounds = array<i64: 128, 32>}, {pipeline_mode = #tpu.pipeline_mode<synchronous>, transform_indices = @transform_2, window_bounds = array<i64: 1, 128>}, {transform_indices = @transform_3, window_bounds = array<i64: 1, 1>}, {transform_indices = @transform_4, window_bounds = array<i64: 1, 256>}]} {
    %c0 = arith.constant 0 : index
    %c0_0 = arith.constant 0 : index
    %0 = vector.load %arg2[%c0, %c0_0] : memref<128x32xf32, #tpu.memory_space<vmem>>, vector<128x32xf32>
    %c0_1 = arith.constant 0 : index
    %c0_2 = arith.constant 0 : index
    %1 = vector.load %arg1[%c0_1, %c0_2] : memref<256x32xf32, #tpu.memory_space<vmem>>, vector<256x32xf32>
    %cst = arith.constant dense<0.000000e+00> : vector<128x256xf32>
    %2 = tpu.matmul %0, %1, %cst {dimension_numbers = #tpu.dot_dimension_numbers<[1], [1], [0], [0], [0, 0, 1, 0], [], []>} : vector<128x32xf32>, vector<256x32xf32>, vector<128x256xf32> -> vector<128x256xf32>
    %cst_3 = arith.constant 0.000000e+00 : f32
    %3 = vector.broadcast %cst_3 : f32 to vector<128x256xf32>
    %4 = arith.maximumf %2, %3 : vector<128x256xf32>
    %c0_4 = arith.constant 0 : index
    %c0_5 = arith.constant 0 : index
    %5 = vector.load %arg3[%c0_4, %c0_5] : memref<1x128xf32, #tpu.memory_space<vmem>>, vector<1x128xf32>
    %cst_6 = arith.constant dense<0.000000e+00> : vector<1x256xf32>
    %6 = tpu.matmul %5, %4, %cst_6 {dimension_numbers = #tpu.dot_dimension_numbers<[1], [0], [0], [1], [0, 0, 1, 1], [], []>} : vector<1x128xf32>, vector<128x256xf32>, vector<1x256xf32> -> vector<1x256xf32>
    %c0_7 = arith.constant 0 : index
    %c0_8 = arith.constant 0 : index
    %7 = memref.load %arg4[%c0_7, %c0_8] : memref<1x1xf32, #tpu.memory_space<smem>>
    %8 = vector.broadcast %7 : f32 to vector<1x256xf32>
    %9 = arith.addf %6, %8 : vector<1x256xf32>
    %cst_9 = arith.constant 0.000000e+00 : f32
    %10 = vector.broadcast %cst_9 : f32 to vector<1x256xf32>
    %11 = arith.subf %10, %9 : vector<1x256xf32>
    %12 = math.exp %11 : vector<1x256xf32>
    %cst_10 = arith.constant 1.000000e+00 : f32
    %13 = vector.broadcast %cst_10 : f32 to vector<1x256xf32>
    %14 = arith.addf %13, %12 : vector<1x256xf32>
    %cst_11 = arith.constant 1.000000e+00 : f32
    %15 = vector.broadcast %cst_11 : f32 to vector<1x256xf32>
    %16 = arith.divf %15, %14 : vector<1x256xf32>
    %c0_12 = arith.constant 0 : index
    %c0_13 = arith.constant 0 : index
    %17 = vector.load %arg5[%c0_12, %c0_13] : memref<1x256xf32, #tpu.memory_space<vmem>>, vector<1x256xf32>
    tpu.vector_store %arg5[%c0_12, %c0_13], %16 {strides = array<i32>} : memref<1x256xf32, #tpu.memory_space<vmem>>, vector<1x256xf32>,
    return
  }
  func.func @transform_0(%arg0: i32) -> (i32, i32) {
    %c0_i32 = arith.constant 0 : i32
    %c0_i32_0 = arith.constant 0 : i32
    return %arg0, %c0_i32 : i32, i32
  }
  func.func @transform_1(%arg0: i32) -> (i32, i32) {
    %c0_i32 = arith.constant 0 : i32
    %c0_i32_0 = arith.constant 0 : i32
    %c0_i32_1 = arith.constant 0 : i32
    return %c0_i32, %c0_i32_0 : i32, i32
  }
  func.func @transform_2(%arg0: i32) -> (i32, i32) {
    %c0_i32 = arith.constant 0 : i32
    %c0_i32_0 = arith.constant 0 : i32
    %c0_i32_1 = arith.constant 0 : i32
    return %c0_i32, %c0_i32_0 : i32, i32
  }
  func.func @transform_3(%arg0: i32) -> (i32, i32) {
    %c0_i32 = arith.constant 0 : i32
    %c0_i32_0 = arith.constant 0 : i32
    %c0_i32_1 = arith.constant 0 : i32
    return %c0_i32, %c0_i32_0 : i32, i32
  }
  func.func @transform_4(%arg0: i32) -> (i32, i32) {
    %c0_i32 = arith.constant 0 : i32
    %c0_i32_0 = arith.constant 0 : i32
    return %c0_i32, %arg0 : i32, i32
  }
}

</mosaic_0001>

<llo_original>
// kernel: tpu_custom_call.1
$region0: #{tpu_custom_call.1}
  #allocation0 [shape = 'u32[]', space=smem, size = 0x4, offset = 0x4, fixed_abs, tag = 'smem constant byte address 0x4 - core index']
  #allocation1 [shape = 'u32[72,128]{1,0:T(1,128)}', space=vmem, size = 0x9000, scoped, tag = 'internal scratch']
  #allocation2 [shape = 'f32[1,1]{1,0:T(1,128)S(6)}', space=smem, size = 0x200, scoped, tag = 'scoped memory for tpu_custom_call.1']
  %s0 = inlined_call_operand.vmem [shape: f32[300,32], index: 0, kind: input, shape index: {}]
  %s1 = inlined_call_operand.vmem [shape: f32[128,32], index: 1, kind: input, shape index: {}]
  %s2 = inlined_call_operand.vmem [shape: f32[1,128], index: 2, kind: input, shape index: {}]
  %s3 = inlined_call_operand.<no memory space> [shape: f32[1,1], index: 3, kind: input, shape index: {}]
  %s4 = inlined_call_operand.hbm [shape: f32[1,300], index: 4, kind: output, shape index: {}]
  %s5 = sld [smem:[#allocation0]]
  $region49: #{tpu_custom_call.1} parent=0
    _
  %s7 = ssub.s32 1, %s5
  %s8 = scalar_select 0, %s7, %s5
  %9 = sst [smem:[#allocation2]] %s3
  $region1: #{tpu_custom_call.1} parent=0
    #allocation3 [shape = 'u8[2048]{0}', space=vmem, size = 0x800, scoped, tag = 'output window, operand 0']
    #allocation4 [shape = 's32[2]{0}', space=sflag, size = 0x8, scoped, tag = 'scoped memory for tpu_custom_call.1']
    %10 = vsyncpa [#allocation4], 0
    %s11 = scalar_lea.sflag [#allocation4], 1
    %12 = vsyncpa %s11, 0
    loop: start=0, step=1, limit=4
    $region2: #{tpu_custom_call.1} parent=1 // loop_pre_header
      _
    $region3: #{tpu_custom_call.1} parent=1 // loop_header
      %s14 = sphi 0, %s18
      %p15 = scmp.ge.s32.totalorder %s14, 4
      %s24 = sphi 0, %s26
      %s27 = sphi 0, %s24
      %s28 = sphi 0, %s27
      %s44 = sphi 0, %s28
      %s48 = sphi 0, %s48
      %s50 = sphi 0, %s48
      %s51 = sphi 0, %s50
      %s65 = sphi 0, %s51
      %s69 = sphi 0, %s69
      %s71 = sphi 0, %s69
      %s72 = sphi 0, %s71
      %s86 = sphi 0, %s72
      %s90 = sphi 0, %s90
      %s92 = sphi 0, %s90
      %s93 = sphi 0, %s92
      %s107 = sphi 0, %s93
      %s113 = sphi 0, %s115
      %s116 = sphi 0, %s113
      %s117 = sphi 0, %s116
      %s133 = sphi 0, %s117
    $region4: #{tpu_custom_call.1} parent=1 // loop_header_branch
      %17 = sbr.rel (%p15) target = $region8
    $region5: #{tpu_custom_call.1} parent=1 // loop_body
      %s19 = ssub.s32 %s14, 1
      %s20 = ssub.s32 %s14, 2
      %s21 = sadd.s32 %s14, 1
      %s22 = ssub.s32 %s14, %s21
      %p23 = scmp.eq.s32.totalorder %s22, 0
      %s25 = sadd.s32 %s24, 1
      %s26 = scalar_select %p23, %s24, %s25
      %p29 = pneg %p23
      %p30 = scmp.eq.s32.totalorder %s14, 1
      %p31 = por %p29, %p30
      %p32 = scmp.ne.s32.totalorder %s24, %s27
      %p33 = scmp.eq.s32.totalorder %s14, 0
      %p34 = por %p32, %p33
      %p35 = scmp.ne.s32.totalorder %s24, %s27
      %p36 = scmp.eq.s32.totalorder %s19, 1
      %p37 = por %p35, %p36
      %p38 = scmp.ne.s32.totalorder %s27, %s28
      %p39 = scmp.eq.s32.totalorder %s19, 0
      %p40 = por %p38, %p39
      %p41 = scmp.ne.s32.totalorder %s27, %s28
      %p42 = scmp.eq.s32.totalorder %s20, 1
      %p43 = por %p41, %p42
      %p45 = scmp.ne.s32.totalorder %s28, %s44
      %p46 = scmp.eq.s32.totalorder %s20, 0
      %p47 = por %p45, %p46
      %s49 = sadd.s32 %s48, 1
      %p52 = scmp.eq.s32.totalorder %s14, 1
      %p53 = scmp.ne.s32.totalorder %s48, %s50
      %p54 = scmp.eq.s32.totalorder %s14, 0
      %p55 = por %p53, %p54
      %p56 = scmp.ne.s32.totalorder %s48, %s50
      %p57 = scmp.eq.s32.totalorder %s19, 1
      %p58 = por %p56, %p57
      %p59 = scmp.ne.s32.totalorder %s50, %s51
      %p60 = scmp.eq.s32.totalorder %s19, 0
      %p61 = por %p59, %p60
      %p62 = scmp.ne.s32.totalorder %s50, %s51
      %p63 = scmp.eq.s32.totalorder %s20, 1
      %p64 = por %p62, %p63
      %p66 = scmp.ne.s32.totalorder %s51, %s65
      %p67 = scmp.eq.s32.totalorder %s20, 0
      %p68 = por %p66, %p67
      %s70 = sadd.s32 %s69, 1
      %p73 = scmp.eq.s32.totalorder %s14, 1
      %p74 = scmp.ne.s32.totalorder %s69, %s71
      %p75 = scmp.eq.s32.totalorder %s14, 0
      %p76 = por %p74, %p75
      %p77 = scmp.ne.s32.totalorder %s69, %s71
      %p78 = scmp.eq.s32.totalorder %s19, 1
      %p79 = por %p77, %p78
      %p80 = scmp.ne.s32.totalorder %s71, %s72
      %p81 = scmp.eq.s32.totalorder %s19, 0
      %p82 = por %p80, %p81
      %p83 = scmp.ne.s32.totalorder %s71, %s72
      %p84 = scmp.eq.s32.totalorder %s20, 1
      %p85 = por %p83, %p84
      %p87 = scmp.ne.s32.totalorder %s72, %s86
      %p88 = scmp.eq.s32.totalorder %s20, 0
      %p89 = por %p87, %p88
      %s91 = sadd.s32 %s90, 1
      %p94 = scmp.eq.s32.totalorder %s14, 1
      %p95 = scmp.ne.s32.totalorder %s90, %s92
      %p96 = scmp.eq.s32.totalorder %s14, 0
      %p97 = por %p95, %p96
      %p98 = scmp.ne.s32.totalorder %s90, %s92
      %p99 = scmp.eq.s32.totalorder %s19, 1
      %p100 = por %p98, %p99
      %p101 = scmp.ne.s32.totalorder %s92, %s93
      %p102 = scmp.eq.s32.totalorder %s19, 0
      %p103 = por %p101, %p102
      %p104 = scmp.ne.s32.totalorder %s92, %s93
      %p105 = scmp.eq.s32.totalorder %s20, 1
      %p106 = por %p104, %p105
      %p108 = scmp.ne.s32.totalorder %s93, %s107
      %p109 = scmp.eq.s32.totalorder %s20, 0
      %p110 = por %p108, %p109
      %s111 = ssub.s32 %s14, %s21
      %p112 = scmp.eq.s32.totalorder %s111, 0
      %s114 = sadd.s32 %s113, 1
      %s115 = scalar_select %p112, %s113, %s114
      %p118 = pneg %p112
      %p119 = scmp.eq.s32.totalorder %s14, 1
      %p120 = por %p118, %p119
      %p121 = scmp.ne.s32.totalorder %s113, %s116
      %p122 = scmp.eq.s32.totalorder %s14, 0
      %p123 = por %p121, %p122
      %p124 = scmp.ne.s32.totalorder %s113, %s116
      %p125 = scmp.eq.s32.totalorder %s19, 1
      %p126 = por %p124, %p125
      %p127 = scmp.ne.s32.totalorder %s116, %s117
      %p128 = scmp.eq.s32.totalorder %s19, 0
      %p129 = por %p127, %p128
      %p130 = scmp.ne.s32.totalorder %s116, %s117
      %p131 = scmp.eq.s32.totalorder %s20, 1
      %p132 = por %p130, %p131
      %p134 = scmp.ne.s32.totalorder %s117, %s133
      %p135 = scmp.eq.s32.totalorder %s20, 0
      %p136 = por %p134, %p135
      %p137 = scmp.le.s32.totalorder 1, %s14
      %p138 = scmp.lt.s32.totalorder %s14, 3
      %p139 = pnand %p137, %p138
      %p140 = pneg %p139
      // Predicated region
      $region9: #{tpu_custom_call.1} parent=5 // pred_check
        _
      $region10: #{tpu_custom_call.1} parent=5 // pred_check_branch
        %142 = sbr.rel (%p139) target = $region12
      $region11: #{tpu_custom_call.1} parent=5 // pred_region
        %s143 = ssub.s32 %s14, 1
        // Predicated region
        $region13: #{tpu_custom_call.1} parent=11 // pred_check
          %p144 = pneg %p61
        $region14: #{tpu_custom_call.1} parent=11 // pred_check_branch
          %146 = sbr.rel (%p144) target = $region16
        $region15: #{tpu_custom_call.1} parent=11 // pred_region
          _
        $region16: #{tpu_custom_call.1} parent=11 // pred_fallthru
          _
        // Predicated region
        $region17: #{tpu_custom_call.1} parent=11 // pred_check
          %p147 = pneg %p82
        $region18: #{tpu_custom_call.1} parent=11 // pred_check_branch
          %149 = sbr.rel (%p147) target = $region20
        $region19: #{tpu_custom_call.1} parent=11 // pred_region
          _
        $region20: #{tpu_custom_call.1} parent=11 // pred_fallthru
          _
        // Predicated region
        $region21: #{tpu_custom_call.1} parent=11 // pred_check
          %p150 = pneg %p103
        $region22: #{tpu_custom_call.1} parent=11 // pred_check_branch
          %152 = sbr.rel (%p150) target = $region24
        $region23: #{tpu_custom_call.1} parent=11 // pred_region
          _
        $region24: #{tpu_custom_call.1} parent=11 // pred_fallthru
          _
      $region12: #{tpu_custom_call.1} parent=5 // pred_fallthru
        _
      %p153 = scmp.lt.s32.totalorder %s14, 2
      // Predicated region
      $region25: #{tpu_custom_call.1} parent=5 // pred_check
        %p154 = pneg %p153
      $region26: #{tpu_custom_call.1} parent=5 // pred_check_branch
        %156 = sbr.rel (%p154) target = $region28
      $region27: #{tpu_custom_call.1} parent=5 // pred_region
        // Predicated region
        $region29: #{tpu_custom_call.1} parent=27 // pred_check
          %p157 = pneg %p34
        $region30: #{tpu_custom_call.1} parent=27 // pred_check_branch
          %159 = sbr.rel (%p157) target = $region32
        $region31: #{tpu_custom_call.1} parent=27 // pred_region
          %s160 = smul.u32 32, %s14
          %s161 = ssub.s32 38, %s160
          %p162 = scmp.lt.s32.totalorder %s161, 32
          %s163 = scalar_select %p162, %s161, 32
          %s164 = smul.u32 8, %s163
          %p165 = scmp.lt.s32.totalorder %s160, 37
          %s166 = scalar_select %p165, %s160, 37
          %s167 = smul.addr %s166, 8
          %s168 = scalar_lea.vmem %s0, %s167
          %s169 = smul.u32 32, %s14
          %s170 = ssub.s32 38, %s169
          %p171 = scmp.lt.s32.totalorder %s170, 32
          %s172 = scalar_select %p171, %s170, 32
          %s173 = smul.u32 8, %s172
        $region32: #{tpu_custom_call.1} parent=27 // pred_fallthru
          _
      $region28: #{tpu_custom_call.1} parent=5 // pred_fallthru
        _
      %p174 = scmp.le.s32.totalorder 1, %s14
      %p175 = scmp.lt.s32.totalorder %s14, 3
      %p176 = pnand %p174, %p175
      %p177 = pneg %p176
      // Predicated region
      $region33: #{tpu_custom_call.1} parent=5 // pred_check
        _
      $region34: #{tpu_custom_call.1} parent=5 // pred_check_branch
        %179 = sbr.rel (%p176) target = $region36
      $region35: #{tpu_custom_call.1} parent=5 // pred_region
        %s180 = ssub.s32 %s14, 1
        %s181 = smul.u32 32, %s19
        %s182 = ssub.s32 38, %s181
        %p183 = scmp.lt.s32.totalorder %s182, 32
        %s184 = scalar_select %p183, %s182, 32
        %s185 = smul.u32 8, %s184
        %p186 = scmp.lt.s32.totalorder %s181, 37
        %s187 = scalar_select %p186, %s181, 37
        %s188 = smul.addr %s187, 8
        %s189 = scalar_lea.vmem %s0, %s188
        %p190 = pneg %p40
        %p191 = pneg %p37
        %p192 = pneg %p61
        %p193 = pneg %p58
        %p194 = pneg %p82
        %p195 = pneg %p79
        %p196 = pneg %p103
        %p197 = pneg %p100
        %p198 = pneg %p129
        %p199 = pneg %p126
        %s200 = sand.u32 %s116, 1
        %s201 = scalar_lea.sflag [#allocation4], %s200
        %s202 = sand.u32 %s116, 1
        %s203 = smul.addr %s202, 2
        %s204 = scalar_lea.vmem [#allocation3], %s203
        %s205 = smul.u32 32, %s19
        %s206 = ssub.s32 38, %s205
        %p207 = scmp.lt.s32.totalorder %s206, 32
        %s208 = scalar_select %p207, %s206, 32
        %s209 = smul.u32 8, %s208
        %p210 = scmp.lt.s32.totalorder %s205, 37
        %s211 = scalar_select %p210, %s205, 37
        %s212 = smul.addr %s211, 8
        %s213 = scalar_lea.vmem %s0, %s212
        %s214 = smul.u32 32, %s19
        %s215 = ssub.s32 38, %s214
        %p216 = scmp.lt.s32.totalorder %s215, 32
        %s217 = scalar_select %p216, %s215, 32
        %s218 = smul.u32 8, %s217
        %s219 = smul.u32 2, %s19
        %s220 = ssub.s32 3, %s219
        %p221 = scmp.lt.s32.totalorder %s220, 2
        %s222 = scalar_select %p221, %s220, 2
        %v223 = vld [vmem:[%s1] sm:$0xff]
        %v224 = vld [vmem:[%s1 + $0x8] sm:$0xff]
        %v225 = vld [vmem:[%s1 + $0x10] sm:$0xff]
        %v226 = vld [vmem:[%s1 + $0x18] sm:$0xff]
        %v227 = vld [vmem:[%s1 + $0x20] sm:$0xff]
        %v228 = vld [vmem:[%s1 + $0x28] sm:$0xff]
        %v229 = vld [vmem:[%s1 + $0x30] sm:$0xff]
        %v230 = vld [vmem:[%s1 + $0x38] sm:$0xff]
        %v231 = vld [vmem:[%s1 + $0x40] sm:$0xff]
        %v232 = vld [vmem:[%s1 + $0x48] sm:$0xff]
        %v233 = vld [vmem:[%s1 + $0x50] sm:$0xff]
        %v234 = vld [vmem:[%s1 + $0x58] sm:$0xff]
        %v235 = vld [vmem:[%s1 + $0x60] sm:$0xff]
        %v236 = vld [vmem:[%s1 + $0x68] sm:$0xff]
        %v237 = vld [vmem:[%s1 + $0x70] sm:$0xff]
        %v238 = vld [vmem:[%s1 + $0x78] sm:$0xff]
        %v239 = vld [vmem:[%s213] sm:$0xff]
        %v240 = vld [vmem:[%s213 + $0x8] sm:$0xff]
        %v241 = vld [vmem:[%s213 + $0x10] sm:$0xff]
        %v242 = vld [vmem:[%s213 + $0x18] sm:$0xff]
        %v243 = vld [vmem:[%s213 + $0x20] sm:$0xff]
        %v244 = vld [vmem:[%s213 + $0x28] sm:$0xff]
        %v245 = vld [vmem:[%s213 + $0x30] sm:$0xff]
        %v246 = vld [vmem:[%s213 + $0x38] sm:$0xff]
        %v247 = vld [vmem:[%s213 + $0x40] sm:$0xff]
        %v248 = vld [vmem:[%s213 + $0x48] sm:$0xff]
        %v249 = vld [vmem:[%s213 + $0x50] sm:$0xff]
        %v250 = vld [vmem:[%s213 + $0x58] sm:$0xff]
        %v251 = vld [vmem:[%s213 + $0x60] sm:$0xff]
        %v252 = vld [vmem:[%s213 + $0x68] sm:$0xff]
        %v253 = vld [vmem:[%s213 + $0x70] sm:$0xff]
        %v254 = vld [vmem:[%s213 + $0x78] sm:$0xff]
        %v255 = vld [vmem:[%s213 + $0x80] sm:$0xff]
        %v256 = vld [vmem:[%s213 + $0x88] sm:$0xff]
        %v257 = vld [vmem:[%s213 + $0x90] sm:$0xff]
        %v258 = vld [vmem:[%s213 + $0x98] sm:$0xff]
        %v259 = vld [vmem:[%s213 + $0xa0] sm:$0xff]
        %v260 = vld [vmem:[%s213 + $0xa8] sm:$0xff]
        %v261 = vld [vmem:[%s213 + $0xb0] sm:$0xff]
        %v262 = vld [vmem:[%s213 + $0xb8] sm:$0xff]
        %v263 = vld [vmem:[%s213 + $0xc0] sm:$0xff]
        %v264 = vld [vmem:[%s213 + $0xc8] sm:$0xff]
        %v265 = vld [vmem:[%s213 + $0xd0] sm:$0xff]
        %v266 = vld [vmem:[%s213 + $0xd8] sm:$0xff]
        %v267 = vld [vmem:[%s213 + $0xe0] sm:$0xff]
        %v268 = vld [vmem:[%s213 + $0xe8] sm:$0xff]
        %v269 = vld [vmem:[%s213 + $0xf0] sm:$0xff]
        %v270 = vld [vmem:[%s213 + $0xf8] sm:$0xff]
        %vm271 = vcmask 261120
        %v273 = vsel %vm271, %v223, 0
        %v276 = vsel %vm271, %v224, 0
        %v279 = vsel %vm271, %v225, 0
        %v282 = vsel %vm271, %v226, 0
        %v285 = vsel %vm271, %v227, 0
        %v288 = vsel %vm271, %v228, 0
        %v291 = vsel %vm271, %v229, 0
        %v294 = vsel %vm271, %v230, 0
        %v297 = vsel %vm271, %v231, 0
        %v300 = vsel %vm271, %v232, 0
        %v303 = vsel %vm271, %v233, 0
        %v306 = vsel %vm271, %v234, 0
        %v309 = vsel %vm271, %v235, 0
        %v312 = vsel %vm271, %v236, 0
        %v315 = vsel %vm271, %v237, 0
        %v318 = vsel %vm271, %v238, 0
        %v321 = vsel %vm271, %v239, 0
        %v324 = vsel %vm271, %v240, 0
        %v327 = vsel %vm271, %v241, 0
        %v330 = vsel %vm271, %v242, 0
        %v333 = vsel %vm271, %v243, 0
        %v336 = vsel %vm271, %v244, 0
        %v339 = vsel %vm271, %v245, 0
        %v342 = vsel %vm271, %v246, 0
        %v345 = vsel %vm271, %v247, 0
        %v348 = vsel %vm271, %v248, 0
        %v351 = vsel %vm271, %v249, 0
        %v354 = vsel %vm271, %v250, 0
        %v357 = vsel %vm271, %v251, 0
        %v360 = vsel %vm271, %v252, 0
        %v363 = vsel %vm271, %v253, 0
        %v366 = vsel %vm271, %v254, 0
        %v369 = vsel %vm271, %v255, 0
        %v372 = vsel %vm271, %v256, 0
        %v375 = vsel %vm271, %v257, 0
        %v378 = vsel %vm271, %v258, 0
        %v381 = vsel %vm271, %v259, 0
        %v384 = vsel %vm271, %v260, 0
        %v387 = vsel %vm271, %v261, 0
        %v390 = vsel %vm271, %v262, 0
        %v393 = vsel %vm271, %v263, 0
        %v396 = vsel %vm271, %v264, 0
        %v399 = vsel %vm271, %v265, 0
        %v402 = vsel %vm271, %v266, 0
        %v405 = vsel %vm271, %v267, 0
        %v408 = vsel %vm271, %v268, 0
        %v411 = vsel %vm271, %v269, 0
        %v414 = vsel %vm271, %v270, 0
        %416 = vmatpush.xpose.msra.mxu0 %v366
        %417 = vmatpush.xpose.msra.mxu0 %v363
        %418 = vmatpush.xpose.msra.mxu0 %v360
        %419 = vmatpush.xpose.msra.mxu0 %v357
        %420 = vmatpush.xpose.msra.mxu0 %v354
        %421 = vmatpush.xpose.msra.mxu0 %v351
        %422 = vmatpush.xpose.msra.mxu0 %v348
        %423 = vmatpush.xpose.msra.mxu0 %v345
        %424 = vmatpush.xpose.msra.mxu0 %v342
        %425 = vmatpush.xpose.msra.mxu0 %v339
        %426 = vmatpush.xpose.msra.mxu0 %v336
        %427 = vmatpush.xpose.msra.mxu0 %v333
        %428 = vmatpush.xpose.msra.mxu0 %v330
        %429 = vmatpush.xpose.msra.mxu0 %v327
        %430 = vmatpush.xpose.msra.mxu0 %v324
        %431 = vmatpush.xpose.msra.mxu0 %v321
        %432 = vmatmul.f32.gmra.mxu0 %v273
        %v433 = vpop.f32.mrf.mxu0
        %v434 = vadd.f32 0.0, %v433
        %435 = vmatmul.f32.gmra.mxu0 %v276
        %v436 = vpop.f32.mrf.mxu0
        %v437 = vadd.f32 0.0, %v436
        %438 = vmatmul.f32.gmra.mxu0 %v279
        %v439 = vpop.f32.mrf.mxu0
        %v440 = vadd.f32 0.0, %v439
        %441 = vmatmul.f32.gmra.mxu0 %v282
        %v442 = vpop.f32.mrf.mxu0
        %v443 = vadd.f32 0.0, %v442
        %444 = vmatmul.f32.gmra.mxu0 %v285
        %v445 = vpop.f32.mrf.mxu0
        %v446 = vadd.f32 0.0, %v445
        %447 = vmatmul.f32.gmra.mxu0 %v288
        %v448 = vpop.f32.mrf.mxu0
        %v449 = vadd.f32 0.0, %v448
        %450 = vmatmul.f32.gmra.mxu0 %v291
        %v451 = vpop.f32.mrf.mxu0
        %v452 = vadd.f32 0.0, %v451
        %453 = vmatmul.f32.gmra.mxu0 %v294
        %v454 = vpop.f32.mrf.mxu0
        %v455 = vadd.f32 0.0, %v454
        %456 = vmatmul.f32.gmra.mxu0 %v297
        %v457 = vpop.f32.mrf.mxu0
        %v458 = vadd.f32 0.0, %v457
        %459 = vmatmul.f32.gmra.mxu0 %v300
        %v460 = vpop.f32.mrf.mxu0
        %v461 = vadd.f32 0.0, %v460
        %462 = vmatmul.f32.gmra.mxu0 %v303
        %v463 = vpop.f32.mrf.mxu0
        %v464 = vadd.f32 0.0, %v463
        %465 = vmatmul.f32.gmra.mxu0 %v306
        %v466 = vpop.f32.mrf.mxu0
        %v467 = vadd.f32 0.0, %v466
        %468 = vmatmul.f32.gmra.mxu0 %v309
        %v469 = vpop.f32.mrf.mxu0
        %v470 = vadd.f32 0.0, %v469
        %471 = vmatmul.f32.gmra.mxu0 %v312
        %v472 = vpop.f32.mrf.mxu0
        %v473 = vadd.f32 0.0, %v472
        %474 = vmatmul.f32.gmra.mxu0 %v315
        %v475 = vpop.f32.mrf.mxu0
        %v476 = vadd.f32 0.0, %v475
        %477 = vmatmul.f32.gmra.mxu0 %v318
        %v478 = vpop.f32.mrf.mxu0
        %v479 = vadd.f32 0.0, %v478
        %480 = vdwg.mxu0
        %481 = vmatpush.xpose.msra.mxu0 %v414
        %482 = vmatpush.xpose.msra.mxu0 %v411
        %483 = vmatpush.xpose.msra.mxu0 %v408
        %484 = vmatpush.xpose.msra.mxu0 %v405
        %485 = vmatpush.xpose.msra.mxu0 %v402
        %486 = vmatpush.xpose.msra.mxu0 %v399
        %487 = vmatpush.xpose.msra.mxu0 %v396
        %488 = vmatpush.xpose.msra.mxu0 %v393
        %489 = vmatpush.xpose.msra.mxu0 %v390
        %490 = vmatpush.xpose.msra.mxu0 %v387
        %491 = vmatpush.xpose.msra.mxu0 %v384
        %492 = vmatpush.xpose.msra.mxu0 %v381
        %493 = vmatpush.xpose.msra.mxu0 %v378
        %494 = vmatpush.xpose.msra.mxu0 %v375
        %495 = vmatpush.xpose.msra.mxu0 %v372
        %496 = vmatpush.xpose.msra.mxu0 %v369
        %497 = vmatmul.f32.gmra.mxu0 %v273
        %v498 = vpop.f32.mrf.mxu0
        %v499 = vadd.f32 0.0, %v498
        %500 = vmatmul.f32.gmra.mxu0 %v276
        %v501 = vpop.f32.mrf.mxu0
        %v502 = vadd.f32 0.0, %v501
        %503 = vmatmul.f32.gmra.mxu0 %v279
        %v504 = vpop.f32.mrf.mxu0
        %v505 = vadd.f32 0.0, %v504
        %506 = vmatmul.f32.gmra.mxu0 %v282
        %v507 = vpop.f32.mrf.mxu0
        %v508 = vadd.f32 0.0, %v507
        %509 = vmatmul.f32.gmra.mxu0 %v285
        %v510 = vpop.f32.mrf.mxu0
        %v511 = vadd.f32 0.0, %v510
        %512 = vmatmul.f32.gmra.mxu0 %v288
        %v513 = vpop.f32.mrf.mxu0
        %v514 = vadd.f32 0.0, %v513
        %515 = vmatmul.f32.gmra.mxu0 %v291
        %v516 = vpop.f32.mrf.mxu0
        %v517 = vadd.f32 0.0, %v516
        %518 = vmatmul.f32.gmra.mxu0 %v294
        %v519 = vpop.f32.mrf.mxu0
        %v520 = vadd.f32 0.0, %v519
        %521 = vmatmul.f32.gmra.mxu0 %v297
        %v522 = vpop.f32.mrf.mxu0
        %v523 = vadd.f32 0.0, %v522
        %524 = vmatmul.f32.gmra.mxu0 %v300
        %v525 = vpop.f32.mrf.mxu0
        %v526 = vadd.f32 0.0, %v525
        %527 = vmatmul.f32.gmra.mxu0 %v303
        %v528 = vpop.f32.mrf.mxu0
        %v529 = vadd.f32 0.0, %v528
        %530 = vmatmul.f32.gmra.mxu0 %v306
        %v531 = vpop.f32.mrf.mxu0
        %v532 = vadd.f32 0.0, %v531
        %533 = vmatmul.f32.gmra.mxu0 %v309
        %v534 = vpop.f32.mrf.mxu0
        %v535 = vadd.f32 0.0, %v534
        %536 = vmatmul.f32.gmra.mxu0 %v312
        %v537 = vpop.f32.mrf.mxu0
        %v538 = vadd.f32 0.0, %v537
        %539 = vmatmul.f32.gmra.mxu0 %v315
        %v540 = vpop.f32.mrf.mxu0
        %v541 = vadd.f32 0.0, %v540
        %542 = vmatmul.f32.gmra.mxu0 %v318
        %v543 = vpop.f32.mrf.mxu0
        %v544 = vadd.f32 0.0, %v543
        %545 = vdwg.mxu0
        %v546 = vmax.f32 %v434, 0.0
        %v547 = vmax.f32 %v499, 0.0
        %v548 = vmax.f32 %v437, 0.0
        %v549 = vmax.f32 %v502, 0.0
        %v550 = vmax.f32 %v440, 0.0
        %v551 = vmax.f32 %v505, 0.0
        %v552 = vmax.f32 %v443, 0.0
        %v553 = vmax.f32 %v508, 0.0
        %v554 = vmax.f32 %v446, 0.0
        %v555 = vmax.f32 %v511, 0.0
        %v556 = vmax.f32 %v449, 0.0
        %v557 = vmax.f32 %v514, 0.0
        %v558 = vmax.f32 %v452, 0.0
        %v559 = vmax.f32 %v517, 0.0
        %v560 = vmax.f32 %v455, 0.0
        %v561 = vmax.f32 %v520, 0.0
        %v562 = vmax.f32 %v458, 0.0
        %v563 = vmax.f32 %v523, 0.0
        %v564 = vmax.f32 %v461, 0.0
        %v565 = vmax.f32 %v526, 0.0
        %v566 = vmax.f32 %v464, 0.0
        %v567 = vmax.f32 %v529, 0.0
        %v568 = vmax.f32 %v467, 0.0
        %v569 = vmax.f32 %v532, 0.0
        %v570 = vmax.f32 %v470, 0.0
        %v571 = vmax.f32 %v535, 0.0
        %v572 = vmax.f32 %v473, 0.0
        %v573 = vmax.f32 %v538, 0.0
        %v574 = vmax.f32 %v476, 0.0
        %v575 = vmax.f32 %v541, 0.0
        %v576 = vmax.f32 %v479, 0.0
        %v577 = vmax.f32 %v544, 0.0
        %v578 = vld [vmem:[%s2] sm:$0x1]
        %s579 = sld [smem:[#allocation2]]
        %v580 = vstv %s579
        %581 = vmatpush.msra.mxu0 %v576
        %582 = vmatpush.msra.mxu0 %v574
        %583 = vmatpush.msra.mxu0 %v572
        %584 = vmatpush.msra.mxu0 %v570
        %585 = vmatpush.msra.mxu0 %v568
        %586 = vmatpush.msra.mxu0 %v566
        %587 = vmatpush.msra.mxu0 %v564
        %588 = vmatpush.msra.mxu0 %v562
        %589 = vmatpush.msra.mxu0 %v560
        %590 = vmatpush.msra.mxu0 %v558
        %591 = vmatpush.msra.mxu0 %v556
        %592 = vmatpush.msra.mxu0 %v554
        %593 = vmatpush.msra.mxu0 %v552
        %594 = vmatpush.msra.mxu0 %v550
        %595 = vmatpush.msra.mxu0 %v548
        %596 = vmatpush.msra.mxu0 %v546
        %597 = vmatmul.f32.gmra.mxu0 %v578
        %v598 = vpop.f32.mrf.mxu0
        %v599 = vadd.f32 %v580, %v598
        %600 = vdwg.mxu0
        %601 = vmatpush.msra.mxu0 %v577
        %602 = vmatpush.msra.mxu0 %v575
        %603 = vmatpush.msra.mxu0 %v573
        %604 = vmatpush.msra.mxu0 %v571
        %605 = vmatpush.msra.mxu0 %v569
        %606 = vmatpush.msra.mxu0 %v567
        %607 = vmatpush.msra.mxu0 %v565
        %608 = vmatpush.msra.mxu0 %v563
        %609 = vmatpush.msra.mxu0 %v561
        %610 = vmatpush.msra.mxu0 %v559
        %611 = vmatpush.msra.mxu0 %v557
        %612 = vmatpush.msra.mxu0 %v555
        %613 = vmatpush.msra.mxu0 %v553
        %614 = vmatpush.msra.mxu0 %v551
        %615 = vmatpush.msra.mxu0 %v549
        %616 = vmatpush.msra.mxu0 %v547
        %617 = vmatmul.f32.gmra.mxu0 %v578
        %v618 = vpop.f32.mrf.mxu0
        %v619 = vadd.f32 %v580, %v618
        %620 = vdwg.mxu0
        %v621 = vsub.f32 0.0, %v599
        %v622 = vsub.f32 0.0, %v619
        %v623 = vmul.f32 %v621, 1.442695
        %v624 = vpow.pop %v623
        %v625 = vmul.f32 %v622, 1.442695
        %v626 = vpow.pop %v625
        %v627 = vadd.f32 %v624, 1.0
        %v628 = vadd.f32 %v626, 1.0
        %v629 = vrcp.pop %v627
        %v630 = vmul.f32 %v627, %v629
        %v631 = vsub.f32 1.0, %v630
        %v632 = vmul.f32 %v629, %v631
        %v633 = vadd.f32 %v629, %v632
        %vm634 = vweird.f32 %v627
        %vm635 = vweird.f32 %v629
        %vm636 = vmor %vm634, %vm635
        %v637 = vsel %vm636, %v629, %v633
        %v638 = vand.u32 2147483647, %v627
        %vm639 = vcmp.eq.f32.partialorder %v638, 8.507059e+37
        %v640 = vand.u32 %v627, 2147483648
        %v641 = vor.u32 1.1754944e-38, %v640
        %v642 = vsel %vm639, %v641, %v637
        %v643 = vmul.f32 1.0, %v642
        %v644 = vrcp.pop %v628
        %v645 = vmul.f32 %v628, %v644
        %v646 = vsub.f32 1.0, %v645
        %v647 = vmul.f32 %v644, %v646
        %v648 = vadd.f32 %v644, %v647
        %vm649 = vweird.f32 %v628
        %vm650 = vweird.f32 %v644
        %vm651 = vmor %vm649, %vm650
        %v652 = vsel %vm651, %v644, %v648
        %v653 = vand.u32 2147483647, %v628
        %vm654 = vcmp.eq.f32.partialorder %v653, 8.507059e+37
        %v655 = vand.u32 %v628, 2147483648
        %v656 = vor.u32 1.1754944e-38, %v655
        %v657 = vsel %vm654, %v656, %v652
        %v658 = vmul.f32 1.0, %v657
        %v661 = vrot.slane %v658, 7
        %vm662 = vcmask 1040384
        %v663 = vsel %vm662, %v643, %v661
        %v665 = vlaneseq
        %vm666 = vcmp.ge.s32.totalorder %v665, 0
        %vm667 = vcmp.lt.s32.totalorder %v665, 256
        %vm668 = vmand %vm666, %vm667
        %669 = vst.msk [vmem:[%s204] sm:$0x3] %vm668, %v663
        %s670 = sand.u32 %s116, 1
        %s671 = scalar_lea.sflag [#allocation4], %s670
        %s672 = sand.u32 %s116, 1
        %s673 = smul.addr %s672, 2
        %s674 = scalar_lea.vmem [#allocation3], %s673
        // Predicated region
        $region37: #{tpu_custom_call.1} parent=35 // pred_check
          %p675 = pneg %p126
        $region38: #{tpu_custom_call.1} parent=35 // pred_check_branch
          %677 = sbr.rel (%p675) target = $region40
        $region39: #{tpu_custom_call.1} parent=35 // pred_region
          %s678 = smul.u32 2, %s19
          %s679 = ssub.s32 3, %s678
          %p680 = scmp.lt.s32.totalorder %s679, 2
          %s681 = scalar_select %p680, %s679, 2
          %s682 = ssub.s32 2, %s681
          %s683 = sshll.u32 %s682, 4
          %684 = vsyncadd %s671, %s683
          %p685 = scmp.ne.s32.totalorder 0, %s681
          %s686 = scalar_lea.hbm %s4, %s678
          %s687 = sshll.u32 %s681, 4
          %s688 = sshll.u32 %s674, 4
          %s689 = int_to_ptr.vmem [resolvable:$true] %s688
          %s690 = sshll.u32 %s686, 4
          %s691 = int_to_ptr.hbm [resolvable:$true] %s690
          %693 = dma.vmem_to_hbm [thread:$0]  (%p685), %s689, %s687, %s691, %s671
        $region40: #{tpu_custom_call.1} parent=35 // pred_fallthru
          _
      $region36: #{tpu_custom_call.1} parent=5 // pred_fallthru
        _
      %p694 = scmp.le.s32.totalorder 2, %s14
      // Predicated region
      $region41: #{tpu_custom_call.1} parent=5 // pred_check
        %p695 = pneg %p694
      $region42: #{tpu_custom_call.1} parent=5 // pred_check_branch
        %697 = sbr.rel (%p695) target = $region44
      $region43: #{tpu_custom_call.1} parent=5 // pred_region
        %s698 = ssub.s32 %s14, 2
        // Predicated region
        $region45: #{tpu_custom_call.1} parent=43 // pred_check
          %p699 = pneg %p132
        $region46: #{tpu_custom_call.1} parent=43 // pred_check_branch
          %701 = sbr.rel (%p699) target = $region48
        $region47: #{tpu_custom_call.1} parent=43 // pred_region
          %s702 = sand.u32 %s117, 1
          %s703 = scalar_lea.sflag [#allocation4], %s702
          %s704 = sand.u32 %s117, 1
          %s705 = smul.addr %s704, 2
          %s706 = scalar_lea.vmem [#allocation3], %s705
          %708 = dma.done %s703, 32
        $region48: #{tpu_custom_call.1} parent=43 // pred_fallthru
          _
      $region44: #{tpu_custom_call.1} parent=5 // pred_fallthru
        _
    $region6: #{tpu_custom_call.1} parent=1 // loop_footer
      %s18 = sadd.s32 1, %s14
    $region7: #{tpu_custom_call.1} parent=1 // loop_footer_branch
      %13 = sbr.rel target = $region3
    $region8: #{tpu_custom_call.1} parent=1 // loop_exit
      _
    %709 = vsyncpa [#allocation4], 1
    %s710 = scalar_lea.sflag [#allocation4], 1
    %711 = vsyncpa %s710, 1

</llo_original>
